<compile_context>
chip_gen: v6e
topology: v6e:2x2x1
jax: 0.10.0
libtpu: 0.0.40
codegen_flags: <defaults>
</compile_context>

<pallas_src>
import functools

import jax
import jax.numpy as jnp
from jax.experimental import pallas as pl
from jax.experimental.pallas import tpu as pltpu

LANE = 128


def dqn_mlp_kernel(x_ref, w1_ref, b1_ref, w2_ref, b2_ref, w3_ref, b3_ref, out_ref):
    # Layer 1: bf16 MXU matmul with f32 accumulation, f32 bias + ReLU epilogue.
    h1 = jnp.dot(x_ref[...], w1_ref[...], preferred_element_type=jnp.float32)
    h1 = jnp.maximum(h1 + b1_ref[...], 0.0)
    # Layer 2 (re-cast activation to bf16 to feed the MXU at full rate).
    h2 = jnp.dot(h1.astype(jnp.bfloat16), w2_ref[...],
                 preferred_element_type=jnp.float32)
    h2 = jnp.maximum(h2 + b2_ref[...], 0.0)
    # Layer 3: Linear (no activation), single downcast at the final store.
    out = jnp.dot(h2.astype(jnp.bfloat16), w3_ref[...],
                  preferred_element_type=jnp.float32)
    out_ref[...] = (out + b3_ref[...]).astype(out_ref.dtype)


def _round_up(d, m):
    return pl.cdiv(d, m) * m


def prepare_params(params):
    """One-time (per optimizer update) parameter prep.

    Hidden dims are padded to lane multiples (lane-dense resident weight
    tiles); the input (f_in) and output (f_out) dims are left un-padded since
    full-extent blocks are legal and this removes padded DMA / writeback.
    Weights are cast to bf16 for the MXU; biases stay f32 for the f32 epilogue.
    """
    w1, b1, w2, b2, w3, b3 = params
    f_in, h1 = w1.shape
    h2, f_out = w2.shape[1], w3.shape[1]
    h1_p, h2_p = _round_up(h1, LANE), _round_up(h2, LANE)

    pad2 = lambda a, r, c: jnp.pad(a, ((0, r - a.shape[0]), (0, c - a.shape[1])))
    return (
        pad2(w1, f_in, h1_p).astype(jnp.bfloat16),
        pad2(b1, 1, h1_p).astype(jnp.float32),
        pad2(w2, h1_p, h2_p).astype(jnp.bfloat16),
        pad2(b2, 1, h2_p).astype(jnp.float32),
        pad2(w3, h2_p, f_out).astype(jnp.bfloat16),
        b3.astype(jnp.float32),
    )


@functools.partial(jax.jit, static_argnames=("tile_b",))
def dqn_forward(x, prepared_params, *, tile_b=256):
    """Forward pass of the 3-layer DQN MLP. x: [B, f_in] f32 -> [B, f_out] f32."""
    w1p, b1p, w2p, b2p, w3p, b3p = prepared_params
    B, f_in = x.shape
    f_out = w3p.shape[1]

    # Single grid step for typical replay batches (<= tile_b); clamp the tile
    # for small batches so we never pad more than one 8-row sublane group.
    tb = min(tile_b, _round_up(B, 8))
    b_p = _round_up(B, tb)

    xp = x.astype(jnp.bfloat16)
    if b_p != B:
        xp = jnp.pad(xp, ((0, b_p - B), (0, 0)))

    grid = (b_p // tb,)
    # Constant index_map -> weights/biases resident in VMEM across the grid.
    resident = lambda a: pl.BlockSpec(a.shape, lambda i: (0, 0))

    out = pl.pallas_call(
        dqn_mlp_kernel,
        out_shape=jax.ShapeDtypeStruct((b_p, f_out), jnp.float32),
        grid=grid,
        in_specs=[
            pl.BlockSpec((tb, f_in), lambda i: (i, 0)),   # activations, tiled on batch
            resident(w1p), resident(b1p),
            resident(w2p), resident(b2p),
            resident(w3p), resident(b3p),
        ],
        out_specs=pl.BlockSpec((tb, f_out), lambda i: (i, 0)),
        compiler_params=pltpu.CompilerParams(
            dimension_semantics=("parallel",)),   # shard batch tiles across TCs (v7x)
    )(xp, w1p, b1p, w2p, b2p, w3p, b3p)

    return out if b_p == B else out[:B]


def init_linear(key, fan_in, fan_out):
    # Deterministic init mimicking PyTorch nn.Linear default (uniform +-1/sqrt(fan_in)).
    kw, kb = jax.random.split(key)
    bound = 1.0 / jnp.sqrt(jnp.float32(fan_in))
    w = jax.random.uniform(kw, (fan_in, fan_out), jnp.float32, -bound, bound)
    b = jax.random.uniform(kb, (1, fan_out), jnp.float32, -bound, bound)
    return w, b


if __name__ == "__main__":
    # DQNAgent(input_layer=16, hidden_layers=[32, 32], output_layer=8)
    input_layer, hidden_layers, output_layer = 16, [32, 32], 8
    batch = 256  # realistic replay-buffer batch folded into one pallas_call / grid step

    key = jax.random.PRNGKey(0)
    k_x, k1, k2, k3 = jax.random.split(key, 4)

    x = jax.random.normal(k_x, (batch, input_layer), jnp.float32)
    w1, b1 = init_linear(k1, input_layer, hidden_layers[0])
    w2, b2 = init_linear(k2, hidden_layers[0], hidden_layers[1])
    w3, b3 = init_linear(k3, hidden_layers[1], output_layer)
    params = (w1, b1, w2, b2, w3, b3)

    # One-time weight prep (would be refreshed only after each optimizer step).
    prepared = prepare_params(params)
    prepared = jax.tree_util.tree_map(jax.block_until_ready, prepared)

    out = dqn_forward(x, prepared)
    jax.block_until_ready(out)

    # Reference check in plain f32 JAX (same math as the PyTorch forward);
    # loose tolerance accounts for the bf16 MXU operands and validates the
    # un-padded (full-extent) contraction / output blocks.
    ref = jnp.maximum(x @ w1 + b1, 0.0)
    ref = jnp.maximum(ref @ w2 + b2, 0.0)
    ref = ref @ w3 + b3
    assert out.shape == (batch, output_layer), out.shape
    max_err = float(jnp.max(jnp.abs(out - ref)))
    assert jnp.allclose(out, ref, atol=5e-2, rtol=5e-2), max_err

    # TODO(synk): fuse target-network forward + TD target + Huber-loss epilogue
    # into this same pallas_call (both weight sets fit trivially in VMEM).
    print("KERNEL_OK")
</pallas_src>

<mosaic_0001>
module attributes {stable_mosaic.version = 11 : i64} {
  func.func @dqn_mlp_kernel(%arg0: i32, %arg1: memref<256x16xbf16, #tpu.memory_space<vmem>>, %arg2: memref<16x128xbf16, #tpu.memory_space<vmem>>, %arg3: memref<1x128xf32, #tpu.memory_space<vmem>>, %arg4: memref<128x128xbf16, #tpu.memory_space<vmem>>, %arg5: memref<1x128xf32, #tpu.memory_space<vmem>>, %arg6: memref<128x8xbf16, #tpu.memory_space<vmem>>, %arg7: memref<1x8xf32, #tpu.memory_space<vmem>>, %arg8: memref<256x8xf32, #tpu.memory_space<vmem>>) attributes {dimension_semantics = [#tpu.dimension_semantics<parallel>], iteration_bounds = array<i64: 1>, scalar_prefetch = 0 : i64, scratch_operands = 0 : i64, tpu.core_type = #tpu.core_type<tc>, window_params = [{transform_indices = @transform_0, window_bounds = array<i64: 256, 16>}, {pipeline_mode = #tpu.pipeline_mode<synchronous>, transform_indices = @transform_1, window_bounds = array<i64: 16, 128>}, {pipeline_mode = #tpu.pipeline_mode<synchronous>, transform_indices = @transform_2, window_bounds = array<i64: 1, 128>}, {pipeline_mode = #tpu.pipeline_mode<synchronous>, transform_indices = @transform_3, window_bounds = array<i64: 128, 128>}, {pipeline_mode = #tpu.pipeline_mode<synchronous>, transform_indices = @transform_4, window_bounds = array<i64: 1, 128>}, {pipeline_mode = #tpu.pipeline_mode<synchronous>, transform_indices = @transform_5, window_bounds = array<i64: 128, 8>}, {pipeline_mode = #tpu.pipeline_mode<synchronous>, transform_indices = @transform_6, window_bounds = array<i64: 1, 8>}, {transform_indices = @transform_7, window_bounds = array<i64: 256, 8>}]} {
    %c0 = arith.constant 0 : index
    %c0_0 = arith.constant 0 : index
    %0 = vector.load %arg1[%c0, %c0_0] : memref<256x16xbf16, #tpu.memory_space<vmem>>, vector<256x16xbf16>
    %c0_1 = arith.constant 0 : index
    %c0_2 = arith.constant 0 : index
    %1 = vector.load %arg2[%c0_1, %c0_2] : memref<16x128xbf16, #tpu.memory_space<vmem>>, vector<16x128xbf16>
    %cst = arith.constant dense<0.000000e+00> : vector<256x128xf32>
    %2 = tpu.matmul %0, %1, %cst {dimension_numbers = #tpu.dot_dimension_numbers<[1], [0], [0], [1], [0, 0, 1, 1], [], []>} : vector<256x16xbf16>, vector<16x128xbf16>, vector<256x128xf32> -> vector<256x128xf32>
    %c0_3 = arith.constant 0 : index
    %c0_4 = arith.constant 0 : index
    %3 = vector.load %arg3[%c0_3, %c0_4] : memref<1x128xf32, #tpu.memory_space<vmem>>, vector<1x128xf32>
    %4 = vector.broadcast %3 : vector<1x128xf32> to vector<256x128xf32>
    %5 = arith.addf %2, %4 : vector<256x128xf32>
    %cst_5 = arith.constant 0.000000e+00 : f32
    %6 = vector.broadcast %cst_5 : f32 to vector<256x128xf32>
    %7 = arith.maximumf %5, %6 : vector<256x128xf32>
    %8 = arith.truncf %7 : vector<256x128xf32> to vector<256x128xbf16>
    %c0_6 = arith.constant 0 : index
    %c0_7 = arith.constant 0 : index
    %9 = vector.load %arg4[%c0_6, %c0_7] : memref<128x128xbf16, #tpu.memory_space<vmem>>, vector<128x128xbf16>
    %cst_8 = arith.constant dense<0.000000e+00> : vector<256x128xf32>
    %10 = tpu.matmul %8, %9, %cst_8 {dimension_numbers = #tpu.dot_dimension_numbers<[1], [0], [0], [1], [0, 0, 1, 1], [], []>} : vector<256x128xbf16>, vector<128x128xbf16>, vector<256x128xf32> -> vector<256x128xf32>
    %c0_9 = arith.constant 0 : index
    %c0_10 = arith.constant 0 : index
    %11 = vector.load %arg5[%c0_9, %c0_10] : memref<1x128xf32, #tpu.memory_space<vmem>>, vector<1x128xf32>
    %12 = vector.broadcast %11 : vector<1x128xf32> to vector<256x128xf32>
    %13 = arith.addf %10, %12 : vector<256x128xf32>
    %cst_11 = arith.constant 0.000000e+00 : f32
    %14 = vector.broadcast %cst_11 : f32 to vector<256x128xf32>
    %15 = arith.maximumf %13, %14 : vector<256x128xf32>
    %16 = arith.truncf %15 : vector<256x128xf32> to vector<256x128xbf16>
    %c0_12 = arith.constant 0 : index
    %c0_13 = arith.constant 0 : index
    %17 = vector.load %arg6[%c0_12, %c0_13] : memref<128x8xbf16, #tpu.memory_space<vmem>>, vector<128x8xbf16>
    %cst_14 = arith.constant dense<0.000000e+00> : vector<256x8xf32>
    %18 = tpu.matmul %16, %17, %cst_14 {dimension_numbers = #tpu.dot_dimension_numbers<[1], [0], [0], [1], [0, 0, 1, 1], [], []>} : vector<256x128xbf16>, vector<128x8xbf16>, vector<256x8xf32> -> vector<256x8xf32>
    %c0_15 = arith.constant 0 : index
    %c0_16 = arith.constant 0 : index
    %19 = vector.load %arg7[%c0_15, %c0_16] : memref<1x8xf32, #tpu.memory_space<vmem>>, vector<1x8xf32>
    %20 = vector.broadcast %19 : vector<1x8xf32> to vector<256x8xf32>
    %21 = arith.addf %18, %20 : vector<256x8xf32>
    %c0_17 = arith.constant 0 : index
    %c0_18 = arith.constant 0 : index
    %22 = vector.load %arg8[%c0_17, %c0_18] : memref<256x8xf32, #tpu.memory_space<vmem>>, vector<256x8xf32>
    tpu.vector_store %arg8[%c0_17, %c0_18], %21 {strides = array<i32>} : memref<256x8xf32, #tpu.memory_space<vmem>>, vector<256x8xf32>,
    return
  }
  func.func @transform_0(%arg0: i32) -> (i32, i32) {
    %c0_i32 = arith.constant 0 : i32
    %c0_i32_0 = arith.constant 0 : i32
    return %arg0, %c0_i32 : i32, i32
  }
  func.func @transform_1(%arg0: i32) -> (i32, i32) {
    %c0_i32 = arith.constant 0 : i32
    %c0_i32_0 = arith.constant 0 : i32
    %c0_i32_1 = arith.constant 0 : i32
    return %c0_i32, %c0_i32_0 : i32, i32
  }
  func.func @transform_2(%arg0: i32) -> (i32, i32) {
    %c0_i32 = arith.constant 0 : i32
    %c0_i32_0 = arith.constant 0 : i32
    %c0_i32_1 = arith.constant 0 : i32
    return %c0_i32, %c0_i32_0 : i32, i32
  }
  func.func @transform_3(%arg0: i32) -> (i32, i32) {
    %c0_i32 = arith.constant 0 : i32
    %c0_i32_0 = arith.constant 0 : i32
    %c0_i32_1 = arith.constant 0 : i32
    return %c0_i32, %c0_i32_0 : i32, i32
  }
  func.func @transform_4(%arg0: i32) -> (i32, i32) {
    %c0_i32 = arith.constant 0 : i32
    %c0_i32_0 = arith.constant 0 : i32
    %c0_i32_1 = arith.constant 0 : i32
    return %c0_i32, %c0_i32_0 : i32, i32
  }
  func.func @transform_5(%arg0: i32) -> (i32, i32) {
    %c0_i32 = arith.constant 0 : i32
    %c0_i32_0 = arith.constant 0 : i32
    %c0_i32_1 = arith.constant 0 : i32
    return %c0_i32, %c0_i32_0 : i32, i32
  }
  func.func @transform_6(%arg0: i32) -> (i32, i32) {
    %c0_i32 = arith.constant 0 : i32
    %c0_i32_0 = arith.constant 0 : i32
    %c0_i32_1 = arith.constant 0 : i32
    return %c0_i32, %c0_i32_0 : i32, i32
  }
  func.func @transform_7(%arg0: i32) -> (i32, i32) {
    %c0_i32 = arith.constant 0 : i32
    %c0_i32_0 = arith.constant 0 : i32
    return %arg0, %c0_i32 : i32, i32
  }
}

</mosaic_0001>

<llo_original>
// kernel: dqn_forward.1
$region0: #{dqn_forward.1}
  #allocation0 [shape = 'u32[]', space=smem, size = 0x4, offset = 0x4, fixed_abs, tag = 'smem constant byte address 0x4 - core index']
  #allocation1 [shape = 'u32[144,128]{1,0:T(1,128)}', space=vmem, size = 0x12000, scoped, tag = 'internal scratch']
  %s0 = inlined_call_operand.vmem [shape: bf16[256,16], index: 0, kind: input, shape index: {}]
  %s1 = inlined_call_operand.vmem [shape: bf16[16,128], index: 1, kind: input, shape index: {}]
  %s2 = inlined_call_operand.vmem [shape: f32[1,128], index: 2, kind: input, shape index: {}]
  %s3 = inlined_call_operand.vmem [shape: bf16[128,128], index: 3, kind: input, shape index: {}]
  %s4 = inlined_call_operand.vmem [shape: f32[1,128], index: 4, kind: input, shape index: {}]
  %s5 = inlined_call_operand.vmem [shape: bf16[128,8], index: 5, kind: input, shape index: {}]
  %s6 = inlined_call_operand.vmem [shape: f32[1,8], index: 6, kind: input, shape index: {}]
  %s7 = inlined_call_operand.vmem [shape: f32[256,8], index: 7, kind: output, shape index: {}]
  %s8 = sld [smem:[#allocation0]]
  $region38: #{dqn_forward.1} parent=0
    _
  %s10 = ssub.s32 1, %s8
  %s11 = scalar_select 0, %s10, %s8
  // Predicated region
  $region2: #{dqn_forward.1} parent=0 // pred_check
    _
  $region3: #{dqn_forward.1} parent=0 // pred_check_branch
    %13 = sbr.rel (0) target = $region5
  $region4: #{dqn_forward.1} parent=0 // pred_region
    _
  $region5: #{dqn_forward.1} parent=0 // pred_fallthru
    _
  // Predicated region
  $region6: #{dqn_forward.1} parent=0 // pred_check
    _
  $region7: #{dqn_forward.1} parent=0 // pred_check_branch
    %15 = sbr.rel (0) target = $region9
  $region8: #{dqn_forward.1} parent=0 // pred_region
    _
  $region9: #{dqn_forward.1} parent=0 // pred_fallthru
    _
  // Predicated region
  $region10: #{dqn_forward.1} parent=0 // pred_check
    _
  $region11: #{dqn_forward.1} parent=0 // pred_check_branch
    %17 = sbr.rel (0) target = $region13
  $region12: #{dqn_forward.1} parent=0 // pred_region
    _
  $region13: #{dqn_forward.1} parent=0 // pred_fallthru
    _
  // Predicated region
  $region14: #{dqn_forward.1} parent=0 // pred_check
    _
  $region15: #{dqn_forward.1} parent=0 // pred_check_branch
    %19 = sbr.rel (0) target = $region17
  $region16: #{dqn_forward.1} parent=0 // pred_region
    _
  $region17: #{dqn_forward.1} parent=0 // pred_fallthru
    _
  // Predicated region
  $region18: #{dqn_forward.1} parent=0 // pred_check
    _
  $region19: #{dqn_forward.1} parent=0 // pred_check_branch
    %21 = sbr.rel (0) target = $region21
  $region20: #{dqn_forward.1} parent=0 // pred_region
    _
  $region21: #{dqn_forward.1} parent=0 // pred_fallthru
    _
  // Predicated region
  $region22: #{dqn_forward.1} parent=0 // pred_check
    _
  $region23: #{dqn_forward.1} parent=0 // pred_check_branch
    %23 = sbr.rel (0) target = $region25
  $region24: #{dqn_forward.1} parent=0 // pred_region
    _
  $region25: #{dqn_forward.1} parent=0 // pred_fallthru
    _
  // Predicated region
  $region26: #{dqn_forward.1} parent=0 // pred_check
    _
  $region27: #{dqn_forward.1} parent=0 // pred_check_branch
    %25 = sbr.rel (0) target = $region29
  $region28: #{dqn_forward.1} parent=0 // pred_region
    _
  $region29: #{dqn_forward.1} parent=0 // pred_fallthru
    _
  %v27 = vld [vmem:[%s0] sm:$0xf]
  %v28 = vld [vmem:[%s0 + $0x4] sm:$0xf]
  %v29 = vld [vmem:[%s0 + $0x8] sm:$0xf]
  %v30 = vld [vmem:[%s0 + $0xc] sm:$0xf]
  %v31 = vld [vmem:[%s0 + $0x10] sm:$0xf]
  %v32 = vld [vmem:[%s0 + $0x14] sm:$0xf]
  %v33 = vld [vmem:[%s0 + $0x18] sm:$0xf]
  %v34 = vld [vmem:[%s0 + $0x1c] sm:$0xf]
  %v35 = vld [vmem:[%s0 + $0x20] sm:$0xf]
  %v36 = vld [vmem:[%s0 + $0x24] sm:$0xf]
  %v37 = vld [vmem:[%s0 + $0x28] sm:$0xf]
  %v38 = vld [vmem:[%s0 + $0x2c] sm:$0xf]
  %v39 = vld [vmem:[%s0 + $0x30] sm:$0xf]
  %v40 = vld [vmem:[%s0 + $0x34] sm:$0xf]
  %v41 = vld [vmem:[%s0 + $0x38] sm:$0xf]
  %v42 = vld [vmem:[%s0 + $0x3c] sm:$0xf]
  %v43 = vld [vmem:[%s0 + $0x40] sm:$0xf]
  %v44 = vld [vmem:[%s0 + $0x44] sm:$0xf]
  %v45 = vld [vmem:[%s0 + $0x48] sm:$0xf]
  %v46 = vld [vmem:[%s0 + $0x4c] sm:$0xf]
  %v47 = vld [vmem:[%s0 + $0x50] sm:$0xf]
  %v48 = vld [vmem:[%s0 + $0x54] sm:$0xf]
  %v49 = vld [vmem:[%s0 + $0x58] sm:$0xf]
  %v50 = vld [vmem:[%s0 + $0x5c] sm:$0xf]
  %v51 = vld [vmem:[%s0 + $0x60] sm:$0xf]
  %v52 = vld [vmem:[%s0 + $0x64] sm:$0xf]
  %v53 = vld [vmem:[%s0 + $0x68] sm:$0xf]
  %v54 = vld [vmem:[%s0 + $0x6c] sm:$0xf]
  %v55 = vld [vmem:[%s0 + $0x70] sm:$0xf]
  %v56 = vld [vmem:[%s0 + $0x74] sm:$0xf]
  %v57 = vld [vmem:[%s0 + $0x78] sm:$0xf]
  %v58 = vld [vmem:[%s0 + $0x7c] sm:$0xf]
  %v59 = vld [vmem:[%s1] sm:$0xf]
  %v60 = vld [vmem:[%s1 + $0x4] sm:$0xf]
  %v61 = vld [vmem:[%s2] sm:$0x1]
  %v63 = vlaneseq
  %v64 = vshrl.u32 %v63, 7
  %v65 = vsub.s32 0, %v64
  %v66 = vrot.slane %v61, %v65
  %v100 = vunpack.c.l.b16 %v27
  %v101 = vunpack.c.l.b16 %v28
  %v102 = vunpack.c.l.b16 %v29
  %v103 = vunpack.c.l.b16 %v30
  %v104 = vunpack.c.l.b16 %v31
  %v105 = vunpack.c.l.b16 %v32
  %v106 = vunpack.c.l.b16 %v33
  %v107 = vunpack.c.l.b16 %v34
  %v108 = vunpack.c.l.b16 %v35
  %v109 = vunpack.c.l.b16 %v36
  %v110 = vunpack.c.l.b16 %v37
  %v111 = vunpack.c.l.b16 %v38
  %v112 = vunpack.c.l.b16 %v39
  %v113 = vunpack.c.l.b16 %v40
  %v114 = vunpack.c.l.b16 %v41
  %v115 = vunpack.c.l.b16 %v42
  %v116 = vunpack.c.l.b16 %v43
  %v117 = vunpack.c.l.b16 %v44
  %v118 = vunpack.c.l.b16 %v45
  %v119 = vunpack.c.l.b16 %v46
  %v120 = vunpack.c.l.b16 %v47
  %v121 = vunpack.c.l.b16 %v48
  %v122 = vunpack.c.l.b16 %v49
  %v123 = vunpack.c.l.b16 %v50
  %v124 = vunpack.c.l.b16 %v51
  %v125 = vunpack.c.l.b16 %v52
  %v126 = vunpack.c.l.b16 %v53
  %v127 = vunpack.c.l.b16 %v54
  %v128 = vunpack.c.l.b16 %v55
  %v129 = vunpack.c.l.b16 %v56
  %v130 = vunpack.c.l.b16 %v57
  %v131 = vunpack.c.l.b16 %v58
  %v132 = vpack.c.b16 %v101, %v100
  %v133 = vpack.c.b16 %v103, %v102
  %v134 = vpack.c.b16 %v105, %v104
  %v135 = vpack.c.b16 %v107, %v106
  %v136 = vpack.c.b16 %v109, %v108
  %v137 = vpack.c.b16 %v111, %v110
  %v138 = vpack.c.b16 %v113, %v112
  %v139 = vpack.c.b16 %v115, %v114
  %v140 = vpack.c.b16 %v117, %v116
  %v141 = vpack.c.b16 %v119, %v118
  %v142 = vpack.c.b16 %v121, %v120
  %v143 = vpack.c.b16 %v123, %v122
  %v144 = vpack.c.b16 %v125, %v124
  %v145 = vpack.c.b16 %v127, %v126
  %v146 = vpack.c.b16 %v129, %v128
  %v147 = vpack.c.b16 %v131, %v130
  %v150 = vunpack.c.l.b16 %v59
  %v151 = vunpack.c.l.b16 %v60
  %v152 = vpack.c.b16 %v151, %v150
  %vm154 = vcmask 130048
  %v156 = vsel %vm154, %v132, 0
  %v159 = vsel %vm154, %v133, 0
  %v162 = vsel %vm154, %v134, 0
  %v165 = vsel %vm154, %v135, 0
  %v168 = vsel %vm154, %v136, 0
  %v171 = vsel %vm154, %v137, 0
  %v174 = vsel %vm154, %v138, 0
  %v177 = vsel %vm154, %v139, 0
  %v180 = vsel %vm154, %v140, 0
  %v183 = vsel %vm154, %v141, 0
  %v186 = vsel %vm154, %v142, 0
  %v189 = vsel %vm154, %v143, 0
  %v192 = vsel %vm154, %v144, 0
  %v195 = vsel %vm154, %v145, 0
  %v198 = vsel %vm154, %v146, 0
  %v201 = vsel %vm154, %v147, 0
  %203 = vmatprep.subr.bf16.mxu0 0
  %204 = vmatpush1.bf16.msra.mxu0 0
  %205 = vmatprep.subr.bf16.mxu0 0
  %206 = vmatpush1.bf16.msra.mxu0 0
  %207 = vmatprep.subr.bf16.mxu0 0
  %208 = vmatpush1.bf16.msra.mxu0 0
  %209 = vmatprep.subr.bf16.mxu0 0
  %210 = vmatpush1.bf16.msra.mxu0 0
  %211 = vmatprep.subr.bf16.mxu0 0
  %212 = vmatpush1.bf16.msra.mxu0 0
  %213 = vmatprep.subr.bf16.mxu0 0
  %214 = vmatpush1.bf16.msra.mxu0 0
  %215 = vmatprep.subr.bf16.mxu0 0
  %216 = vmatpush1.bf16.msra.mxu0 0
  %217 = vmatprep.subr.bf16.mxu0 0
  %218 = vmatpush1.bf16.msra.mxu0 %v152
  %219 = vmatprep.subr.bf16.mxu0 0
  %220 = vmatpush2.bf16.msra.mxu0 0
  %221 = vmatprep.subr.bf16.mxu0 0
  %222 = vmatpush2.bf16.msra.mxu0 0
  %223 = vmatprep.subr.bf16.mxu0 0
  %224 = vmatpush2.bf16.msra.mxu0 0
  %225 = vmatprep.subr.bf16.mxu0 0
  %226 = vmatpush2.bf16.msra.mxu0 0
  %227 = vmatprep.subr.bf16.mxu0 0
  %228 = vmatpush2.bf16.msra.mxu0 0
  %229 = vmatprep.subr.bf16.mxu0 0
  %230 = vmatpush2.bf16.msra.mxu0 0
  %231 = vmatprep.subr.bf16.mxu0 0
  %232 = vmatpush2.bf16.msra.mxu0 0
  %233 = vmatprep.subr.bf16.mxu0 0
  %234 = vmatpush2.bf16.msra.mxu0 0
  %235 = vmatprep.mubr.bf16.mxu0 0
  %236 = vmatmul.mubr.bf16.gmra.mxu0 %v156
  %v237 = vpop.f32.mrf.mxu0
  %v238 = vadd.f32 %v66, %v237
  %v239 = vpop.f32.mrf.mxu0
  %v240 = vpop.f32.mrf.mxu0
  %v241 = vadd.f32 %v66, %v240
  %v242 = vpop.f32.mrf.mxu0
  %243 = vmatprep.mubr.bf16.mxu0 0
  %244 = vmatmul.mubr.bf16.gmra.mxu0 %v159
  %v245 = vpop.f32.mrf.mxu0
  %v246 = vadd.f32 %v66, %v245
  %v247 = vpop.f32.mrf.mxu0
  %v248 = vpop.f32.mrf.mxu0
  %v249 = vadd.f32 %v66, %v248
  %v250 = vpop.f32.mrf.mxu0
  %251 = vmatprep.mubr.bf16.mxu0 0
  %252 = vmatmul.mubr.bf16.gmra.mxu0 %v162
  %v253 = vpop.f32.mrf.mxu0
  %v254 = vadd.f32 %v66, %v253
  %v255 = vpop.f32.mrf.mxu0
  %v256 = vpop.f32.mrf.mxu0
  %v257 = vadd.f32 %v66, %v256
  %v258 = vpop.f32.mrf.mxu0
  %259 = vmatprep.mubr.bf16.mxu0 0
  %260 = vmatmul.mubr.bf16.gmra.mxu0 %v165
  %v261 = vpop.f32.mrf.mxu0
  %v262 = vadd.f32 %v66, %v261
  %v263 = vpop.f32.mrf.mxu0
  %v264 = vpop.f32.mrf.mxu0
  %v265 = vadd.f32 %v66, %v264
  %v266 = vpop.f32.mrf.mxu0
  %267 = vmatprep.mubr.bf16.mxu0 0
  %268 = vmatmul.mubr.bf16.gmra.mxu0 %v168
  %v269 = vpop.f32.mrf.mxu0
  %v270 = vadd.f32 %v66, %v269
  %v271 = vpop.f32.mrf.mxu0
  %v272 = vpop.f32.mrf.mxu0
  %v273 = vadd.f32 %v66, %v272
  %v274 = vpop.f32.mrf.mxu0
  %275 = vmatprep.mubr.bf16.mxu0 0
  %276 = vmatmul.mubr.bf16.gmra.mxu0 %v171
  %v277 = vpop.f32.mrf.mxu0
  %v278 = vadd.f32 %v66, %v277
  %v279 = vpop.f32.mrf.mxu0
  %v280 = vpop.f32.mrf.mxu0
  %v281 = vadd.f32 %v66, %v280
  %v282 = vpop.f32.mrf.mxu0
  %283 = vmatprep.mubr.bf16.mxu0 0
  %284 = vmatmul.mubr.bf16.gmra.mxu0 %v174
  %v285 = vpop.f32.mrf.mxu0
  %v286 = vadd.f32 %v66, %v285
  %v287 = vpop.f32.mrf.mxu0
  %v288 = vpop.f32.mrf.mxu0
  %v289 = vadd.f32 %v66, %v288
  %v290 = vpop.f32.mrf.mxu0
  %291 = vmatprep.mubr.bf16.mxu0 0
  %292 = vmatmul.mubr.bf16.gmra.mxu0 %v177
  %v293 = vpop.f32.mrf.mxu0
  %v294 = vadd.f32 %v66, %v293
  %v295 = vpop.f32.mrf.mxu0
  %v296 = vpop.f32.mrf.mxu0
  %v297 = vadd.f32 %v66, %v296
  %v298 = vpop.f32.mrf.mxu0
  %299 = vmatprep.mubr.bf16.mxu0 0
  %300 = vmatmul.mubr.bf16.gmra.mxu0 %v180
  %v301 = vpop.f32.mrf.mxu0
  %v302 = vadd.f32 %v66, %v301
  %v303 = vpop.f32.mrf.mxu0
  %v304 = vpop.f32.mrf.mxu0
  %v305 = vadd.f32 %v66, %v304
  %v306 = vpop.f32.mrf.mxu0
  %307 = vmatprep.mubr.bf16.mxu0 0
  %308 = vmatmul.mubr.bf16.gmra.mxu0 %v183
  %v309 = vpop.f32.mrf.mxu0
  %v310 = vadd.f32 %v66, %v309
  %v311 = vpop.f32.mrf.mxu0
  %v312 = vpop.f32.mrf.mxu0
  %v313 = vadd.f32 %v66, %v312
  %v314 = vpop.f32.mrf.mxu0
  %315 = vmatprep.mubr.bf16.mxu0 0
  %316 = vmatmul.mubr.bf16.gmra.mxu0 %v186
  %v317 = vpop.f32.mrf.mxu0
  %v318 = vadd.f32 %v66, %v317
  %v319 = vpop.f32.mrf.mxu0
  %v320 = vpop.f32.mrf.mxu0
  %v321 = vadd.f32 %v66, %v320
  %v322 = vpop.f32.mrf.mxu0
  %323 = vmatprep.mubr.bf16.mxu0 0
  %324 = vmatmul.mubr.bf16.gmra.mxu0 %v189
  %v325 = vpop.f32.mrf.mxu0
  %v326 = vadd.f32 %v66, %v325
  %v327 = vpop.f32.mrf.mxu0
  %v328 = vpop.f32.mrf.mxu0
  %v329 = vadd.f32 %v66, %v328
  %v330 = vpop.f32.mrf.mxu0
  %331 = vmatprep.mubr.bf16.mxu0 0
  %332 = vmatmul.mubr.bf16.gmra.mxu0 %v192
  %v333 = vpop.f32.mrf.mxu0
  %v334 = vadd.f32 %v66, %v333
  %v335 = vpop.f32.mrf.mxu0
  %v336 = vpop.f32.mrf.mxu0
  %v337 = vadd.f32 %v66, %v336
  %v338 = vpop.f32.mrf.mxu0
  %339 = vmatprep.mubr.bf16.mxu0 0
  %340 = vmatmul.mubr.bf16.gmra.mxu0 %v195
  %v341 = vpop.f32.mrf.mxu0
  %v342 = vadd.f32 %v66, %v341
  %v343 = vpop.f32.mrf.mxu0
  %v344 = vpop.f32.mrf.mxu0
  %v345 = vadd.f32 %v66, %v344
  %v346 = vpop.f32.mrf.mxu0
  %347 = vmatprep.mubr.bf16.mxu0 0
  %348 = vmatmul.mubr.bf16.gmra.mxu0 %v198
  %v349 = vpop.f32.mrf.mxu0
  %v350 = vadd.f32 %v66, %v349
  %v351 = vpop.f32.mrf.mxu0
  %v352 = vpop.f32.mrf.mxu0
  %v353 = vadd.f32 %v66, %v352
  %v354 = vpop.f32.mrf.mxu0
  %355 = vmatprep.mubr.bf16.mxu0 0
  %356 = vmatmul.mubr.bf16.gmra.mxu0 %v201
  %v357 = vpop.f32.mrf.mxu0
  %v358 = vadd.f32 %v66, %v357
  %v359 = vpop.f32.mrf.mxu0
  %v360 = vpop.f32.mrf.mxu0
  %v361 = vadd.f32 %v66, %v360
  %v362 = vpop.f32.mrf.mxu0
  %363 = vdwg.mxu0
  %v364 = vmax.f32 %v238, 0.0
  %v365 = vmax.f32 %v241, 0.0
  %v366 = vmax.f32 %v246, 0.0
  %v367 = vmax.f32 %v249, 0.0
  %v368 = vmax.f32 %v254, 0.0
  %v369 = vmax.f32 %v257, 0.0
  %v370 = vmax.f32 %v262, 0.0
  %v371 = vmax.f32 %v265, 0.0
  %v372 = vmax.f32 %v270, 0.0
  %v373 = vmax.f32 %v273, 0.0
  %v374 = vmax.f32 %v278, 0.0
  %v375 = vmax.f32 %v281, 0.0
  %v376 = vmax.f32 %v286, 0.0
  %v377 = vmax.f32 %v289, 0.0
  %v378 = vmax.f32 %v294, 0.0
  %v379 = vmax.f32 %v297, 0.0
  %v380 = vmax.f32 %v302, 0.0
  %v381 = vmax.f32 %v305, 0.0
  %v382 = vmax.f32 %v310, 0.0
  %v383 = vmax.f32 %v313, 0.0
  %v384 = vmax.f32 %v318, 0.0
  %v385 = vmax.f32 %v321, 0.0
  %v386 = vmax.f32 %v326, 0.0
  %v387 = vmax.f32 %v329, 0.0
  %v388 = vmax.f32 %v334, 0.0
  %v389 = vmax.f32 %v337, 0.0
  %v390 = vmax.f32 %v342, 0.0
  %v391 = vmax.f32 %v345, 0.0
  %v392 = vmax.f32 %v350, 0.0
  %v393 = vmax.f32 %v353, 0.0
  %v394 = vmax.f32 %v358, 0.0
  %v395 = vmax.f32 %v361, 0.0
  %v396 = vpack.c.bf16 %v365, %v364
  %v397 = vpack.c.bf16 %v367, %v366
  %v398 = vpack.c.bf16 %v369, %v368
  %v399 = vpack.c.bf16 %v371, %v370
  %v400 = vpack.c.bf16 %v373, %v372
  %v401 = vpack.c.bf16 %v375, %v374
  %v402 = vpack.c.bf16 %v377, %v376
  %v403 = vpack.c.bf16 %v379, %v378
  %v404 = vpack.c.bf16 %v381, %v380
  %v405 = vpack.c.bf16 %v383, %v382
  %v406 = vpack.c.bf16 %v385, %v384
  %v407 = vpack.c.bf16 %v387, %v386
  %v408 = vpack.c.bf16 %v389, %v388
  %v409 = vpack.c.bf16 %v391, %v390
  %v410 = vpack.c.bf16 %v393, %v392
  %v411 = vpack.c.bf16 %v395, %v394
  %v412 = vld [vmem:[%s3] sm:$0xf]
  %v413 = vld [vmem:[%s3 + $0x4] sm:$0xf]
  %v414 = vld [vmem:[%s3 + $0x8] sm:$0xf]
  %v415 = vld [vmem:[%s3 + $0xc] sm:$0xf]
  %v416 = vld [vmem:[%s3 + $0x10] sm:$0xf]
  %v417 = vld [vmem:[%s3 + $0x14] sm:$0xf]
  %v418 = vld [vmem:[%s3 + $0x18] sm:$0xf]
  %v419 = vld [vmem:[%s3 + $0x1c] sm:$0xf]
  %v420 = vld [vmem:[%s3 + $0x20] sm:$0xf]
  %v421 = vld [vmem:[%s3 + $0x24] sm:$0xf]
  %v422 = vld [vmem:[%s3 + $0x28] sm:$0xf]
  %v423 = vld [vmem:[%s3 + $0x2c] sm:$0xf]
  %v424 = vld [vmem:[%s3 + $0x30] sm:$0xf]
  %v425 = vld [vmem:[%s3 + $0x34] sm:$0xf]
  %v426 = vld [vmem:[%s3 + $0x38] sm:$0xf]
  %v427 = vld [vmem:[%s3 + $0x3c] sm:$0xf]
  %v428 = vld [vmem:[%s4] sm:$0x1]
  %v430 = vlaneseq
  %v431 = vshrl.u32 %v430, 7
  %v432 = vsub.s32 0, %v431
  %v433 = vrot.slane %v428, %v432
  %v451 = vunpack.c.l.b16 %v412
  %v452 = vunpack.c.l.b16 %v413
  %v453 = vunpack.c.l.b16 %v414
  %v454 = vunpack.c.l.b16 %v415
  %v455 = vunpack.c.l.b16 %v416
  %v456 = vunpack.c.l.b16 %v417
  %v457 = vunpack.c.l.b16 %v418
  %v458 = vunpack.c.l.b16 %v419
  %v459 = vunpack.c.l.b16 %v420
  %v460 = vunpack.c.l.b16 %v421
  %v461 = vunpack.c.l.b16 %v422
  %v462 = vunpack.c.l.b16 %v423
  %v463 = vunpack.c.l.b16 %v424
  %v464 = vunpack.c.l.b16 %v425
  %v465 = vunpack.c.l.b16 %v426
  %v466 = vunpack.c.l.b16 %v427
  %v467 = vpack.c.b16 %v452, %v451
  %v468 = vpack.c.b16 %v454, %v453
  %v469 = vpack.c.b16 %v456, %v455
  %v470 = vpack.c.b16 %v458, %v457
  %v471 = vpack.c.b16 %v460, %v459
  %v472 = vpack.c.b16 %v462, %v461
  %v473 = vpack.c.b16 %v464, %v463
  %v474 = vpack.c.b16 %v466, %v465
  %483 = vmatprep.subr.bf16.mxu0 0
  %484 = vmatpush1.bf16.msra.mxu0 %v474
  %485 = vmatprep.subr.bf16.mxu0 0
  %486 = vmatpush1.bf16.msra.mxu0 %v473
  %487 = vmatprep.subr.bf16.mxu0 0
  %488 = vmatpush1.bf16.msra.mxu0 %v472
  %489 = vmatprep.subr.bf16.mxu0 0
  %490 = vmatpush1.bf16.msra.mxu0 %v471
  %491 = vmatprep.subr.bf16.mxu0 0
  %492 = vmatpush1.bf16.msra.mxu0 %v470
  %493 = vmatprep.subr.bf16.mxu0 0
  %494 = vmatpush1.bf16.msra.mxu0 %v469
  %495 = vmatprep.subr.bf16.mxu0 0
  %496 = vmatpush1.bf16.msra.mxu0 %v468
  %497 = vmatprep.subr.bf16.mxu0 0
  %498 = vmatpush1.bf16.msra.mxu0 %v467
  %499 = vmatprep.subr.bf16.mxu0 0
  %500 = vmatpush2.bf16.msra.mxu0 0
  %501 = vmatprep.subr.bf16.mxu0 0
  %502 = vmatpush2.bf16.msra.mxu0 0
  %503 = vmatprep.subr.bf16.mxu0 0
  %504 = vmatpush2.bf16.msra.mxu0 0
  %505 = vmatprep.subr.bf16.mxu0 0
  %506 = vmatpush2.bf16.msra.mxu0 0
  %507 = vmatprep.subr.bf16.mxu0 0
  %508 = vmatpush2.bf16.msra.mxu0 0
  %509 = vmatprep.subr.bf16.mxu0 0
  %510 = vmatpush2.bf16.msra.mxu0 0
  %511 = vmatprep.subr.bf16.mxu0 0
  %512 = vmatpush2.bf16.msra.mxu0 0
  %513 = vmatprep.subr.bf16.mxu0 0
  %514 = vmatpush2.bf16.msra.mxu0 0
  %515 = vmatprep.mubr.bf16.mxu0 0
  %516 = vmatmul.mubr.bf16.gmra.mxu0 %v396
  %v517 = vpop.f32.mrf.mxu0
  %v518 = vadd.f32 %v433, %v517
  %v519 = vpop.f32.mrf.mxu0
  %v520 = vpop.f32.mrf.mxu0
  %v521 = vadd.f32 %v433, %v520
  %v522 = vpop.f32.mrf.mxu0
  %523 = vmatprep.mubr.bf16.mxu0 0
  %524 = vmatmul.mubr.bf16.gmra.mxu0 %v397
  %v525 = vpop.f32.mrf.mxu0
  %v526 = vadd.f32 %v433, %v525
  %v527 = vpop.f32.mrf.mxu0
  %v528 = vpop.f32.mrf.mxu0
  %v529 = vadd.f32 %v433, %v528
  %v530 = vpop.f32.mrf.mxu0
  %531 = vmatprep.mubr.bf16.mxu0 0
  %532 = vmatmul.mubr.bf16.gmra.mxu0 %v398
  %v533 = vpop.f32.mrf.mxu0
  %v534 = vadd.f32 %v433, %v533
  %v535 = vpop.f32.mrf.mxu0
  %v536 = vpop.f32.mrf.mxu0
  %v537 = vadd.f32 %v433, %v536
  %v538 = vpop.f32.mrf.mxu0
  %539 = vmatprep.mubr.bf16.mxu0 0
  %540 = vmatmul.mubr.bf16.gmra.mxu0 %v399
  %v541 = vpop.f32.mrf.mxu0
  %v542 = vadd.f32 %v433, %v541
  %v543 = vpop.f32.mrf.mxu0
  %v544 = vpop.f32.mrf.mxu0
  %v545 = vadd.f32 %v433, %v544
  %v546 = vpop.f32.mrf.mxu0
  %547 = vmatprep.mubr.bf16.mxu0 0
  %548 = vmatmul.mubr.bf16.gmra.mxu0 %v400
  %v549 = vpop.f32.mrf.mxu0
  %v550 = vadd.f32 %v433, %v549
  %v551 = vpop.f32.mrf.mxu0
  %v552 = vpop.f32.mrf.mxu0
  %v553 = vadd.f32 %v433, %v552
  %v554 = vpop.f32.mrf.mxu0
  %555 = vmatprep.mubr.bf16.mxu0 0
  %556 = vmatmul.mubr.bf16.gmra.mxu0 %v401
  %v557 = vpop.f32.mrf.mxu0
  %v558 = vadd.f32 %v433, %v557
  %v559 = vpop.f32.mrf.mxu0
  %v560 = vpop.f32.mrf.mxu0
  %v561 = vadd.f32 %v433, %v560
  %v562 = vpop.f32.mrf.mxu0
  %563 = vmatprep.mubr.bf16.mxu0 0
  %564 = vmatmul.mubr.bf16.gmra.mxu0 %v402
  %v565 = vpop.f32.mrf.mxu0
  %v566 = vadd.f32 %v433, %v565
  %v567 = vpop.f32.mrf.mxu0
  %v568 = vpop.f32.mrf.mxu0
  %v569 = vadd.f32 %v433, %v568
  %v570 = vpop.f32.mrf.mxu0
  %571 = vmatprep.mubr.bf16.mxu0 0
  %572 = vmatmul.mubr.bf16.gmra.mxu0 %v403
  %v573 = vpop.f32.mrf.mxu0
  %v574 = vadd.f32 %v433, %v573
  %v575 = vpop.f32.mrf.mxu0
  %v576 = vpop.f32.mrf.mxu0
  %v577 = vadd.f32 %v433, %v576
  %v578 = vpop.f32.mrf.mxu0
  %579 = vmatprep.mubr.bf16.mxu0 0
  %580 = vmatmul.mubr.bf16.gmra.mxu0 %v404
  %v581 = vpop.f32.mrf.mxu0
  %v582 = vadd.f32 %v433, %v581
  %v583 = vpop.f32.mrf.mxu0
  %v584 = vpop.f32.mrf.mxu0
  %v585 = vadd.f32 %v433, %v584
  %v586 = vpop.f32.mrf.mxu0
  %587 = vmatprep.mubr.bf16.mxu0 0
  %588 = vmatmul.mubr.bf16.gmra.mxu0 %v405
  %v589 = vpop.f32.mrf.mxu0
  %v590 = vadd.f32 %v433, %v589
  %v591 = vpop.f32.mrf.mxu0
  %v592 = vpop.f32.mrf.mxu0
  %v593 = vadd.f32 %v433, %v592
  %v594 = vpop.f32.mrf.mxu0
  %595 = vmatprep.mubr.bf16.mxu0 0
  %596 = vmatmul.mubr.bf16.gmra.mxu0 %v406
  %v597 = vpop.f32.mrf.mxu0
  %v598 = vadd.f32 %v433, %v597
  %v599 = vpop.f32.mrf.mxu0
  %v600 = vpop.f32.mrf.mxu0
  %v601 = vadd.f32 %v433, %v600
  %v602 = vpop.f32.mrf.mxu0
  %603 = vmatprep.mubr.bf16.mxu0 0
  %604 = vmatmul.mubr.bf16.gmra.mxu0 %v407
  %v605 = vpop.f32.mrf.mxu0
  %v606 = vadd.f32 %v433, %v605
  %v607 = vpop.f32.mrf.mxu0
  %v608 = vpop.f32.mrf.mxu0
  %v609 = vadd.f32 %v433, %v608
  %v610 = vpop.f32.mrf.mxu0
  %611 = vmatprep.mubr.bf16.mxu0 0
  %612 = vmatmul.mubr.bf16.gmra.mxu0 %v408
  %v613 = vpop.f32.mrf.mxu0
  %v614 = vadd.f32 %v433, %v613
  %v615 = vpop.f32.mrf.mxu0
  %v616 = vpop.f32.mrf.mxu0
  %v617 = vadd.f32 %v433, %v616
  %v618 = vpop.f32.mrf.mxu0
  %619 = vmatprep.mubr.bf16.mxu0 0
  %620 = vmatmul.mubr.bf16.gmra.mxu0 %v409
  %v621 = vpop.f32.mrf.mxu0
  %v622 = vadd.f32 %v433, %v621
  %v623 = vpop.f32.mrf.mxu0
  %v624 = vpop.f32.mrf.mxu0
  %v625 = vadd.f32 %v433, %v624
  %v626 = vpop.f32.mrf.mxu0
  %627 = vmatprep.mubr.bf16.mxu0 0
  %628 = vmatmul.mubr.bf16.gmra.mxu0 %v410
  %v629 = vpop.f32.mrf.mxu0
  %v630 = vadd.f32 %v433, %v629
  %v631 = vpop.f32.mrf.mxu0
  %v632 = vpop.f32.mrf.mxu0
  %v633 = vadd.f32 %v433, %v632
  %v634 = vpop.f32.mrf.mxu0
  %635 = vmatprep.mubr.bf16.mxu0 0
  %636 = vmatmul.mubr.bf16.gmra.mxu0 %v411
  %v637 = vpop.f32.mrf.mxu0
  %v638 = vadd.f32 %v433, %v637
  %v639 = vpop.f32.mrf.mxu0
  %v640 = vpop.f32.mrf.mxu0
  %v641 = vadd.f32 %v433, %v640
  %v642 = vpop.f32.mrf.mxu0
  %643 = vdwg.mxu0
  %v644 = vmax.f32 %v518, 0.0
  %v645 = vmax.f32 %v521, 0.0
  %v646 = vmax.f32 %v526, 0.0
  %v647 = vmax.f32 %v529, 0.0
  %v648 = vmax.f32 %v534, 0.0
  %v649 = vmax.f32 %v537, 0.0
  %v650 = vmax.f32 %v542, 0.0
  %v651 = vmax.f32 %v545, 0.0
  %v652 = vmax.f32 %v550, 0.0
  %v653 = vmax.f32 %v553, 0.0
  %v654 = vmax.f32 %v558, 0.0
  %v655 = vmax.f32 %v561, 0.0
  %v656 = vmax.f32 %v566, 0.0
  %v657 = vmax.f32 %v569, 0.0
  %v658 = vmax.f32 %v574, 0.0
  %v659 = vmax.f32 %v577, 0.0
  %v660 = vmax.f32 %v582, 0.0
  %v661 = vmax.f32 %v585, 0.0
  %v662 = vmax.f32 %v590, 0.0
  %v663 = vmax.f32 %v593, 0.0
  %v664 = vmax.f32 %v598, 0.0
  %v665 = vmax.f32 %v601, 0.0
  %v666 = vmax.f32 %v606, 0.0
  %v667 = vmax.f32 %v609, 0.0
  %v668 = vmax.f32 %v614, 0.0
  %v669 = vmax.f32 %v617, 0.0
  %v670 = vmax.f32 %v622, 0.0
  %v671 = vmax.f32 %v625, 0.0
  %v672 = vmax.f32 %v630, 0.0
  %v673 = vmax.f32 %v633, 0.0
  %v674 = vmax.f32 %v638, 0.0
  %v675 = vmax.f32 %v641, 0.0
  %v676 = vpack.c.bf16 %v645, %v644
  %v677 = vpack.c.bf16 %v647, %v646
  %v678 = vpack.c.bf16 %v649, %v648
  %v679 = vpack.c.bf16 %v651, %v650
  %v680 = vpack.c.bf16 %v653, %v652
  %v681 = vpack.c.bf16 %v655, %v654
  %v682 = vpack.c.bf16 %v657, %v656
  %v683 = vpack.c.bf16 %v659, %v658
  %v684 = vpack.c.bf16 %v661, %v660
  %v685 = vpack.c.bf16 %v663, %v662
  %v686 = vpack.c.bf16 %v665, %v664
  %v687 = vpack.c.bf16 %v667, %v666
  %v688 = vpack.c.bf16 %v669, %v668
  %v689 = vpack.c.bf16 %v671, %v670
  %v690 = vpack.c.bf16 %v673, %v672
  %v691 = vpack.c.bf16 %v675, %v674
  %v692 = vld [vmem:[%s5] sm:$0xf]
  %v693 = vld [vmem:[%s5 + $0x4] sm:$0xf]
  %v694 = vld [vmem:[%s5 + $0x8] sm:$0xf]
  %v695 = vld [vmem:[%s5 + $0xc] sm:$0xf]
  %v696 = vld [vmem:[%s5 + $0x10] sm:$0xf]
  %v697 = vld [vmem:[%s5 + $0x14] sm:$0xf]
  %v698 = vld [vmem:[%s5 + $0x18] sm:$0xf]
  %v699 = vld [vmem:[%s5 + $0x1c] sm:$0xf]
  %v700 = vld [vmem:[%s5 + $0x20] sm:$0xf]
  %v701 = vld [vmem:[%s5 + $0x24] sm:$0xf]
  %v702 = vld [vmem:[%s5 + $0x28] sm:$0xf]
  %v703 = vld [vmem:[%s5 + $0x2c] sm:$0xf]
  %v704 = vld [vmem:[%s5 + $0x30] sm:$0xf]
  %v705 = vld [vmem:[%s5 + $0x34] sm:$0xf]
  %v706 = vld [vmem:[%s5 + $0x38] sm:$0xf]
  %v707 = vld [vmem:[%s5 + $0x3c] sm:$0xf]
  %v708 = vld [vmem:[%s6] sm:$0x1]
  %v710 = vlaneseq
  %v711 = vshrl.u32 %v710, 7
  %v712 = vsub.s32 0, %v711
  %v713 = vrot.slane %v708, %v712
  %v731 = vunpack.c.l.b16 %v692
  %v732 = vunpack.c.l.b16 %v693
  %v733 = vunpack.c.l.b16 %v694
  %v734 = vunpack.c.l.b16 %v695
  %v735 = vunpack.c.l.b16 %v696
  %v736 = vunpack.c.l.b16 %v697
  %v737 = vunpack.c.l.b16 %v698
  %v738 = vunpack.c.l.b16 %v699
  %v739 = vunpack.c.l.b16 %v700
  %v740 = vunpack.c.l.b16 %v701
  %v741 = vunpack.c.l.b16 %v702
  %v742 = vunpack.c.l.b16 %v703
  %v743 = vunpack.c.l.b16 %v704
  %v744 = vunpack.c.l.b16 %v705
  %v745 = vunpack.c.l.b16 %v706
  %v746 = vunpack.c.l.b16 %v707
  %v747 = vpack.c.b16 %v732, %v731
  %v748 = vpack.c.b16 %v734, %v733
  %v749 = vpack.c.b16 %v736, %v735
  %v750 = vpack.c.b16 %v738, %v737
  %v751 = vpack.c.b16 %v740, %v739
  %v752 = vpack.c.b16 %v742, %v741
  %v753 = vpack.c.b16 %v744, %v743
  %v754 = vpack.c.b16 %v746, %v745
  %763 = vmatprep.subr.bf16.mxu0 0
  %764 = vmatpush1.bf16.msra.mxu0 %v754
  %765 = vmatprep.subr.bf16.mxu0 0
  %766 = vmatpush1.bf16.msra.mxu0 %v753
  %767 = vmatprep.subr.bf16.mxu0 0
  %768 = vmatpush1.bf16.msra.mxu0 %v752
  %769 = vmatprep.subr.bf16.mxu0 0
  %770 = vmatpush1.bf16.msra.mxu0 %v751
  %771 = vmatprep.subr.bf16.mxu0 0
  %772 = vmatpush1.bf16.msra.mxu0 %v750
  %773 = vmatprep.subr.bf16.mxu0 0
  %774 = vmatpush1.bf16.msra.mxu0 %v749
  %775 = vmatprep.subr.bf16.mxu0 0
  %776 = vmatpush1.bf16.msra.mxu0 %v748
  %777 = vmatprep.subr.bf16.mxu0 0
  %778 = vmatpush1.bf16.msra.mxu0 %v747
  %779 = vmatprep.subr.bf16.mxu0 0
  %780 = vmatpush2.bf16.msra.mxu0 0
  %781 = vmatprep.subr.bf16.mxu0 0
  %782 = vmatpush2.bf16.msra.mxu0 0
  %783 = vmatprep.subr.bf16.mxu0 0
  %784 = vmatpush2.bf16.msra.mxu0 0
  %785 = vmatprep.subr.bf16.mxu0 0
  %786 = vmatpush2.bf16.msra.mxu0 0
  %787 = vmatprep.subr.bf16.mxu0 0
  %788 = vmatpush2.bf16.msra.mxu0 0
  %789 = vmatprep.subr.bf16.mxu0 0
  %790 = vmatpush2.bf16.msra.mxu0 0
  %791 = vmatprep.subr.bf16.mxu0 0
  %792 = vmatpush2.bf16.msra.mxu0 0
  %793 = vmatprep.subr.bf16.mxu0 0
  %794 = vmatpush2.bf16.msra.mxu0 0
  %795 = vmatprep.mubr.bf16.mxu0 0
  %796 = vmatmul.mubr.bf16.gmra.mxu0 %v676
  %v797 = vpop.f32.mrf.mxu0
  %v798 = vadd.f32 %v713, %v797
  %v799 = vpop.f32.mrf.mxu0
  %v800 = vpop.f32.mrf.mxu0
  %v801 = vadd.f32 %v713, %v800
  %v802 = vpop.f32.mrf.mxu0
  %803 = vmatprep.mubr.bf16.mxu0 0
  %804 = vmatmul.mubr.bf16.gmra.mxu0 %v677
  %v805 = vpop.f32.mrf.mxu0
  %v806 = vadd.f32 %v713, %v805
  %v807 = vpop.f32.mrf.mxu0
  %v808 = vpop.f32.mrf.mxu0
  %v809 = vadd.f32 %v713, %v808
  %v810 = vpop.f32.mrf.mxu0
  %811 = vmatprep.mubr.bf16.mxu0 0
  %812 = vmatmul.mubr.bf16.gmra.mxu0 %v678
  %v813 = vpop.f32.mrf.mxu0
  %v814 = vadd.f32 %v713, %v813
  %v815 = vpop.f32.mrf.mxu0
  %v816 = vpop.f32.mrf.mxu0
  %v817 = vadd.f32 %v713, %v816
  %v818 = vpop.f32.mrf.mxu0
  %819 = vmatprep.mubr.bf16.mxu0 0
  %820 = vmatmul.mubr.bf16.gmra.mxu0 %v679
  %v821 = vpop.f32.mrf.mxu0
  %v822 = vadd.f32 %v713, %v821
  %v823 = vpop.f32.mrf.mxu0
  %v824 = vpop.f32.mrf.mxu0
  %v825 = vadd.f32 %v713, %v824
  %v826 = vpop.f32.mrf.mxu0
  %827 = vmatprep.mubr.bf16.mxu0 0
  %828 = vmatmul.mubr.bf16.gmra.mxu0 %v680
  %v829 = vpop.f32.mrf.mxu0
  %v830 = vadd.f32 %v713, %v829
  %v831 = vpop.f32.mrf.mxu0
  %v832 = vpop.f32.mrf.mxu0
  %v833 = vadd.f32 %v713, %v832
  %v834 = vpop.f32.mrf.mxu0
  %835 = vmatprep.mubr.bf16.mxu0 0
  %836 = vmatmul.mubr.bf16.gmra.mxu0 %v681
  %v837 = vpop.f32.mrf.mxu0
  %v838 = vadd.f32 %v713, %v837
  %v839 = vpop.f32.mrf.mxu0
  %v840 = vpop.f32.mrf.mxu0
  %v841 = vadd.f32 %v713, %v840
  %v842 = vpop.f32.mrf.mxu0
  %843 = vmatprep.mubr.bf16.mxu0 0
  %844 = vmatmul.mubr.bf16.gmra.mxu0 %v682
  %v845 = vpop.f32.mrf.mxu0
  %v846 = vadd.f32 %v713, %v845
  %v847 = vpop.f32.mrf.mxu0
  %v848 = vpop.f32.mrf.mxu0
  %v849 = vadd.f32 %v713, %v848
  %v850 = vpop.f32.mrf.mxu0
  %851 = vmatprep.mubr.bf16.mxu0 0
  %852 = vmatmul.mubr.bf16.gmra.mxu0 %v683
  %v853 = vpop.f32.mrf.mxu0
  %v854 = vadd.f32 %v713, %v853
  %v855 = vpop.f32.mrf.mxu0
  %v856 = vpop.f32.mrf.mxu0
  %v857 = vadd.f32 %v713, %v856
  %v858 = vpop.f32.mrf.mxu0
  %859 = vmatprep.mubr.bf16.mxu0 0
  %860 = vmatmul.mubr.bf16.gmra.mxu0 %v684
  %v861 = vpop.f32.mrf.mxu0
  %v862 = vadd.f32 %v713, %v861
  %v863 = vpop.f32.mrf.mxu0
  %v864 = vpop.f32.mrf.mxu0
  %v865 = vadd.f32 %v713, %v864
  %v866 = vpop.f32.mrf.mxu0
  %867 = vmatprep.mubr.bf16.mxu0 0
  %868 = vmatmul.mubr.bf16.gmra.mxu0 %v685
  %v869 = vpop.f32.mrf.mxu0
  %v870 = vadd.f32 %v713, %v869
  %v871 = vpop.f32.mrf.mxu0
  %v872 = vpop.f32.mrf.mxu0
  %v873 = vadd.f32 %v713, %v872
  %v874 = vpop.f32.mrf.mxu0
  %875 = vmatprep.mubr.bf16.mxu0 0
  %876 = vmatmul.mubr.bf16.gmra.mxu0 %v686
  %v877 = vpop.f32.mrf.mxu0
  %v878 = vadd.f32 %v713, %v877
  %v879 = vpop.f32.mrf.mxu0
  %v880 = vpop.f32.mrf.mxu0
  %v881 = vadd.f32 %v713, %v880
  %v882 = vpop.f32.mrf.mxu0
  %883 = vmatprep.mubr.bf16.mxu0 0
  %884 = vmatmul.mubr.bf16.gmra.mxu0 %v687
  %v885 = vpop.f32.mrf.mxu0
  %v886 = vadd.f32 %v713, %v885
  %v887 = vpop.f32.mrf.mxu0
  %v888 = vpop.f32.mrf.mxu0
  %v889 = vadd.f32 %v713, %v888
  %v890 = vpop.f32.mrf.mxu0
  %891 = vmatprep.mubr.bf16.mxu0 0
  %892 = vmatmul.mubr.bf16.gmra.mxu0 %v688
  %v893 = vpop.f32.mrf.mxu0
  %v894 = vadd.f32 %v713, %v893
  %v895 = vpop.f32.mrf.mxu0
  %v896 = vpop.f32.mrf.mxu0
  %v897 = vadd.f32 %v713, %v896
  %v898 = vpop.f32.mrf.mxu0
  %899 = vmatprep.mubr.bf16.mxu0 0
  %900 = vmatmul.mubr.bf16.gmra.mxu0 %v689
  %v901 = vpop.f32.mrf.mxu0
  %v902 = vadd.f32 %v713, %v901
  %v903 = vpop.f32.mrf.mxu0
  %v904 = vpop.f32.mrf.mxu0
  %v905 = vadd.f32 %v713, %v904
  %v906 = vpop.f32.mrf.mxu0
  %907 = vmatprep.mubr.bf16.mxu0 0
  %908 = vmatmul.mubr.bf16.gmra.mxu0 %v690
  %v909 = vpop.f32.mrf.mxu0
  %v910 = vadd.f32 %v713, %v909
  %v911 = vpop.f32.mrf.mxu0
  %v912 = vpop.f32.mrf.mxu0
  %v913 = vadd.f32 %v713, %v912
  %v914 = vpop.f32.mrf.mxu0
  %915 = vmatprep.mubr.bf16.mxu0 0
  %916 = vmatmul.mubr.bf16.gmra.mxu0 %v691
  %v917 = vpop.f32.mrf.mxu0
  %v918 = vadd.f32 %v713, %v917
  %v919 = vpop.f32.mrf.mxu0
  %v920 = vpop.f32.mrf.mxu0
  %v921 = vadd.f32 %v713, %v920
  %v922 = vpop.f32.mrf.mxu0
  %923 = vdwg.mxu0
  %vm924 = vcmask 64512
  %925 = vst.msk [vmem:[%s7] sm:$0xff] %vm924, %v798
  %926 = vst.msk [vmem:[%s7 + $0x8] sm:$0xff] %vm924, %v801
  %927 = vst.msk [vmem:[%s7 + $0x10] sm:$0xff] %vm924, %v806
  %928 = vst.msk [vmem:[%s7 + $0x18] sm:$0xff] %vm924, %v809
  %929 = vst.msk [vmem:[%s7 + $0x20] sm:$0xff] %vm924, %v814
  %930 = vst.msk [vmem:[%s7 + $0x28] sm:$0xff] %vm924, %v817
  %931 = vst.msk [vmem:[%s7 + $0x30] sm:$0xff] %vm924, %v822
  %932 = vst.msk [vmem:[%s7 + $0x38] sm:$0xff] %vm924, %v825
  %933 = vst.msk [vmem:[%s7 + $0x40] sm:$0xff] %vm924, %v830
  %934 = vst.msk [vmem:[%s7 + $0x48] sm:$0xff] %vm924, %v833
  %935 = vst.msk [vmem:[%s7 + $0x50] sm:$0xff] %vm924, %v838
  %936 = vst.msk [vmem:[%s7 + $0x58] sm:$0xff] %vm924, %v841
  %937 = vst.msk [vmem:[%s7 + $0x60] sm:$0xff] %vm924, %v846
  %938 = vst.msk [vmem:[%s7 + $0x68] sm:$0xff] %vm924, %v849
  %939 = vst.msk [vmem:[%s7 + $0x70] sm:$0xff] %vm924, %v854
  %940 = vst.msk [vmem:[%s7 + $0x78] sm:$0xff] %vm924, %v857
  %941 = vst.msk [vmem:[%s7 + $0x80] sm:$0xff] %vm924, %v862
  %942 = vst.msk [vmem:[%s7 + $0x88] sm:$0xff] %vm924, %v865
  %943 = vst.msk [vmem:[%s7 + $0x90] sm:$0xff] %vm924, %v870
  %944 = vst.msk [vmem:[%s7 + $0x98] sm:$0xff] %vm924, %v873
  %945 = vst.msk [vmem:[%s7 + $0xa0] sm:$0xff] %vm924, %v878
  %946 = vst.msk [vmem:[%s7 + $0xa8] sm:$0xff] %vm924, %v881
  %947 = vst.msk [vmem:[%s7 + $0xb0] sm:$0xff] %vm924, %v886
  %948 = vst.msk [vmem:[%s7 + $0xb8] sm:$0xff] %vm924, %v889
  %949 = vst.msk [vmem:[%s7 + $0xc0] sm:$0xff] %vm924, %v894
  %950 = vst.msk [vmem:[%s7 + $0xc8] sm:$0xff] %vm924, %v897
  %951 = vst.msk [vmem:[%s7 + $0xd0] sm:$0xff] %vm924, %v902
  %952 = vst.msk [vmem:[%s7 + $0xd8] sm:$0xff] %vm924, %v905
  %953 = vst.msk [vmem:[%s7 + $0xe0] sm:$0xff] %vm924, %v910
  %954 = vst.msk [vmem:[%s7 + $0xe8] sm:$0xff] %vm924, %v913
  %955 = vst.msk [vmem:[%s7 + $0xf0] sm:$0xff] %vm924, %v918
  %956 = vst.msk [vmem:[%s7 + $0xf8] sm:$0xff] %vm924, %v921
  // Predicated region
  $region30: #{dqn_forward.1} parent=0 // pred_check
    _
  $region31: #{dqn_forward.1} parent=0 // pred_check_branch
    %958 = sbr.rel (0) target = $region33
  $region32: #{dqn_forward.1} parent=0 // pred_region
    _
  $region33: #{dqn_forward.1} parent=0 // pred_fallthru
    _
  // Predicated region
  $region34: #{dqn_forward.1} parent=0 // pred_check
    _
  $region35: #{dqn_forward.1} parent=0 // pred_check_branch
    %960 = sbr.rel (0) target = $region37
  $region36: #{dqn_forward.1} parent=0 // pred_region
    _
  $region37: #{dqn_forward.1} parent=0 // pred_fallthru
    _

</llo_original>
